<compile_context>
chip_gen: v6e
topology: v6e:2x2x1
jax: 0.10.0
libtpu: 0.0.40
codegen_flags: <defaults>
</compile_context>

<pallas_src>
import jax
import jax.numpy as jnp
from jax.experimental import pallas as pl
from jax.experimental.pallas import tpu as pltpu

LAYER_DIMS = [8, 512, 256, 128, 64, 32, 3]      # input_features=8, action_space=3
PADDED_DIMS = [8, 512, 256, 128, 128, 128, 8]   # lane-friendly padded widths
N_LAYERS = len(LAYER_DIMS) - 1                  # 6 dense layers
OUT_W = PADDED_DIMS[-1]                         # padded output width (8)
DEFAULT_TILE_B = 1024                           # large batch tile (amortizes per-step overhead)


def _cdiv(a, b):
    return (a + b - 1) // b


def _round_up(n, m):
    return ((n + m - 1) // m) * m


def _use_bf16_activations():
    """bf16 VPU/EUP exists on v6e/v7x; keep f32 tanh on v5e and older."""
    try:
        kind = jax.devices()[0].device_kind.lower()
    except Exception:
        return False
    return ("v6" in kind) or ("v7" in kind)


def _make_dqn_kernel(n_splits, act_bf16):
    def kernel(x_ref, *refs):
        """refs = (w1, b1, ..., w6, b6, out_ref).

        x_ref:   [TILE_B, 8]      f32
        w_i:     [in_p, out_p]    bf16 (padded per PADDED_DIMS, zeros in pad)
        b_i:     [1, out_p]       f32
        out_ref: [TILE_B, OUT_W]  f32
        """
        out_ref = refs[-1]
        p_refs = refs[:-1]
        tile_b = x_ref.shape[0]
        half = tile_b // n_splits

        ws = [p_refs[2 * i][...] for i in range(N_LAYERS)]        # bf16
        bs = [p_refs[2 * i + 1][...] for i in range(N_LAYERS)]    # f32

        # Independent per-half chains; Python loop unrolls at trace time so
        # the scheduler can overlap MXU (dot) of one half with EUP (tanh) of
        # the other.
        for s in range(n_splits):
            h = x_ref[pl.ds(s * half, half), :].astype(jnp.bfloat16)
            for i in range(N_LAYERS):
                acc = jnp.dot(h, ws[i], preferred_element_type=jnp.float32) + bs[i]
                if i < N_LAYERS - 1:
                    if act_bf16:
                        h = jnp.tanh(acc.astype(jnp.bfloat16))     # bf16 EUP (v6e/v7x)
                    else:
                        h = jnp.tanh(acc).astype(jnp.bfloat16)     # f32 EUP (v5e-safe)
                else:
                    h = acc                                        # final layer stays f32
            out_ref[pl.ds(s * half, half), :] = h.astype(out_ref.dtype)

    return kernel


def _prepare_flat_params(params):
    """Zero-pad weights/biases to PADDED_DIMS; weights bf16, biases f32.

    Padding is numerically exact: padded bias entries and weight rows/cols
    are zero, and tanh(0) == 0, so padded activation lanes stay zero.
    """
    flat = []
    for i, (w, b) in enumerate(params):
        in_p, out_p = PADDED_DIMS[i], PADDED_DIMS[i + 1]
        w = jnp.pad(w, ((0, in_p - w.shape[0]), (0, out_p - w.shape[1])))
        b = jnp.pad(b, ((0, 0), (0, out_p - b.shape[1])))
        flat.append(w.astype(jnp.bfloat16))
        flat.append(b.astype(jnp.float32))
    return flat


def _choose_tiling(batch, tile_cap):
    """Pick (tile_b, b_padded, grid) with minimal padding and >=2 (even) tiles
    for reasonably sized batches (keeps both v7x TensorCores busy)."""
    n_tiles = max(1, _cdiv(batch, tile_cap))
    if n_tiles == 1 and batch >= 128:
        n_tiles = 2
    if n_tiles > 1 and n_tiles % 2 == 1:
        n_tiles += 1                      # even tile count: balanced v7x megacore split
    tile_b = _round_up(_cdiv(batch, n_tiles), 8)
    b_padded = _round_up(batch, tile_b)
    return tile_b, b_padded, b_padded // tile_b


def dqn_forward(x, params, tile_cap=DEFAULT_TILE_B):
    """x: [B, 8] float32; params: list of (W [in,out], b [1,out]) f32 per layer."""
    B = x.shape[0]
    in_f = LAYER_DIMS[0]
    out_f = LAYER_DIMS[-1]

    tile_b, b_padded, n_tiles = _choose_tiling(B, tile_cap)
    if b_padded != B:
        x = jnp.pad(x, ((0, b_padded - B), (0, 0)))

    flat = _prepare_flat_params(params)

    # x / out tiled along batch; params full-shape, constant index_map so they
    # stay resident in VMEM (single DMA, ~0.4 MB bf16).
    in_specs = [pl.BlockSpec((tile_b, in_f), lambda i: (i, 0))]
    for arr in flat:
        in_specs.append(pl.BlockSpec(arr.shape, lambda i: (0, 0)))
    out_spec = pl.BlockSpec((tile_b, OUT_W), lambda i: (i, 0))

    # Split the tile into two independent halves only when it is big enough.
    n_splits = 2 if (tile_b >= 256 and tile_b % 16 == 0) else 1
    kernel = _make_dqn_kernel(n_splits, _use_bf16_activations())

    out_padded = pl.pallas_call(
        kernel,
        out_shape=jax.ShapeDtypeStruct((b_padded, OUT_W), jnp.float32),
        grid=(n_tiles,),
        in_specs=in_specs,
        out_specs=out_spec,
        compiler_params=pltpu.CompilerParams(
            dimension_semantics=("parallel",),      # shard batch tiles across v7x TCs
            vmem_limit_bytes=32 * 1024 * 1024,      # headroom above v5e's 16 MiB default
        ),
    )(x, *flat)

    # Drop batch padding and the zero-padded output columns (3 real Q-values).
    return out_padded[:B, :out_f]


def init_params(key):
    """Deterministic init mimicking PyTorch nn.Linear defaults:
    U(-1/sqrt(fan_in), 1/sqrt(fan_in)) for both weight and bias."""
    params = []
    for i in range(N_LAYERS):
        fan_in, fan_out = LAYER_DIMS[i], LAYER_DIMS[i + 1]
        key, kw, kb = jax.random.split(key, 3)
        bound = 1.0 / jnp.sqrt(jnp.float32(fan_in))
        w = jax.random.uniform(kw, (fan_in, fan_out), jnp.float32, -bound, bound)
        b = jax.random.uniform(kb, (1, fan_out), jnp.float32, -bound, bound)
        params.append((w, b))
    return params


def reference_forward(x, params):
    """Pure-JAX f32 reference."""
    h = x
    for i, (w, b) in enumerate(params):
        h = h @ w + b
        if i < N_LAYERS - 1:
            h = jnp.tanh(h)
    return h


if __name__ == "__main__":
    key = jax.random.PRNGKey(0)
    key, kx1, kx2, kx3 = jax.random.split(key, 4)
    params = init_params(key)

    # bf16 MXU weights / bf16 activations vs f32 reference -> loosened tolerance.
    ATOL = RTOL = 5e-2

    # Small-batch check (batch=2; tile shrinks to 8, grid=(1,)).
    batch = 2
    x_small = jax.random.normal(kx1, (batch, LAYER_DIMS[0]), jnp.float32)
    out_small = jax.block_until_ready(dqn_forward(x_small, params))
    ref_small = reference_forward(x_small, params)
    assert out_small.shape == (batch, LAYER_DIMS[-1])
    assert jnp.allclose(out_small, ref_small, atol=ATOL, rtol=RTOL), \
        "small-batch mismatch vs reference"

    # Non-multiple batch exercises the adaptive-tile / padded path (grid=(2,)).
    batch2 = 300
    x_mid = jax.random.normal(kx2, (batch2, LAYER_DIMS[0]), jnp.float32)
    out_mid = jax.block_until_ready(dqn_forward(x_mid, params))
    ref_mid = reference_forward(x_mid, params)
    assert out_mid.shape == (batch2, LAYER_DIMS[-1])
    assert jnp.allclose(out_mid, ref_mid, atol=ATOL, rtol=RTOL), \
        "mid-batch mismatch vs reference"

    # Large batch exercises the big-tile + split-half path (tile=1024, grid=(2,)).
    batch3 = 2048
    x_big = jax.random.normal(kx3, (batch3, LAYER_DIMS[0]), jnp.float32)
    out_big = jax.block_until_ready(dqn_forward(x_big, params))
    ref_big = reference_forward(x_big, params)
    assert out_big.shape == (batch3, LAYER_DIMS[-1])
    assert jnp.allclose(out_big, ref_big, atol=ATOL, rtol=RTOL), \
        "large-batch mismatch vs reference"

    print("KERNEL_OK")
</pallas_src>

<mosaic_0001>
module attributes {stable_mosaic.version = 11 : i64} {
  func.func @kernel(%arg0: i32, %arg1: memref<8x8xf32, #tpu.memory_space<vmem>>, %arg2: memref<8x512xbf16, #tpu.memory_space<vmem>>, %arg3: memref<1x512xf32, #tpu.memory_space<vmem>>, %arg4: memref<512x256xbf16, #tpu.memory_space<vmem>>, %arg5: memref<1x256xf32, #tpu.memory_space<vmem>>, %arg6: memref<256x128xbf16, #tpu.memory_space<vmem>>, %arg7: memref<1x128xf32, #tpu.memory_space<vmem>>, %arg8: memref<128x128xbf16, #tpu.memory_space<vmem>>, %arg9: memref<1x128xf32, #tpu.memory_space<vmem>>, %arg10: memref<128x128xbf16, #tpu.memory_space<vmem>>, %arg11: memref<1x128xf32, #tpu.memory_space<vmem>>, %arg12: memref<128x8xbf16, #tpu.memory_space<vmem>>, %arg13: memref<1x8xf32, #tpu.memory_space<vmem>>, %arg14: memref<8x8xf32, #tpu.memory_space<vmem>>) attributes {dimension_semantics = [#tpu.dimension_semantics<parallel>], iteration_bounds = array<i64: 1>, scalar_prefetch = 0 : i64, scratch_operands = 0 : i64, tpu.core_type = #tpu.core_type<tc>, window_params = [{transform_indices = @transform_0, window_bounds = array<i64: 8, 8>}, {pipeline_mode = #tpu.pipeline_mode<synchronous>, transform_indices = @transform_1, window_bounds = array<i64: 8, 512>}, {pipeline_mode = #tpu.pipeline_mode<synchronous>, transform_indices = @transform_2, window_bounds = array<i64: 1, 512>}, {pipeline_mode = #tpu.pipeline_mode<synchronous>, transform_indices = @transform_3, window_bounds = array<i64: 512, 256>}, {pipeline_mode = #tpu.pipeline_mode<synchronous>, transform_indices = @transform_4, window_bounds = array<i64: 1, 256>}, {pipeline_mode = #tpu.pipeline_mode<synchronous>, transform_indices = @transform_5, window_bounds = array<i64: 256, 128>}, {pipeline_mode = #tpu.pipeline_mode<synchronous>, transform_indices = @transform_6, window_bounds = array<i64: 1, 128>}, {pipeline_mode = #tpu.pipeline_mode<synchronous>, transform_indices = @transform_7, window_bounds = array<i64: 128, 128>}, {pipeline_mode = #tpu.pipeline_mode<synchronous>, transform_indices = @transform_8, window_bounds = array<i64: 1, 128>}, {pipeline_mode = #tpu.pipeline_mode<synchronous>, transform_indices = @transform_9, window_bounds = array<i64: 128, 128>}, {pipeline_mode = #tpu.pipeline_mode<synchronous>, transform_indices = @transform_10, window_bounds = array<i64: 1, 128>}, {pipeline_mode = #tpu.pipeline_mode<synchronous>, transform_indices = @transform_11, window_bounds = array<i64: 128, 8>}, {pipeline_mode = #tpu.pipeline_mode<synchronous>, transform_indices = @transform_12, window_bounds = array<i64: 1, 8>}, {transform_indices = @transform_13, window_bounds = array<i64: 8, 8>}]} {
    %c0 = arith.constant 0 : index
    %c0_0 = arith.constant 0 : index
    %0 = vector.load %arg2[%c0, %c0_0] : memref<8x512xbf16, #tpu.memory_space<vmem>>, vector<8x512xbf16>
    %c0_1 = arith.constant 0 : index
    %c0_2 = arith.constant 0 : index
    %1 = vector.load %arg4[%c0_1, %c0_2] : memref<512x256xbf16, #tpu.memory_space<vmem>>, vector<512x256xbf16>
    %c0_3 = arith.constant 0 : index
    %c0_4 = arith.constant 0 : index
    %2 = vector.load %arg6[%c0_3, %c0_4] : memref<256x128xbf16, #tpu.memory_space<vmem>>, vector<256x128xbf16>
    %c0_5 = arith.constant 0 : index
    %c0_6 = arith.constant 0 : index
    %3 = vector.load %arg8[%c0_5, %c0_6] : memref<128x128xbf16, #tpu.memory_space<vmem>>, vector<128x128xbf16>
    %c0_7 = arith.constant 0 : index
    %c0_8 = arith.constant 0 : index
    %4 = vector.load %arg10[%c0_7, %c0_8] : memref<128x128xbf16, #tpu.memory_space<vmem>>, vector<128x128xbf16>
    %c0_9 = arith.constant 0 : index
    %c0_10 = arith.constant 0 : index
    %5 = vector.load %arg12[%c0_9, %c0_10] : memref<128x8xbf16, #tpu.memory_space<vmem>>, vector<128x8xbf16>
    %c0_11 = arith.constant 0 : index
    %c0_12 = arith.constant 0 : index
    %6 = vector.load %arg3[%c0_11, %c0_12] : memref<1x512xf32, #tpu.memory_space<vmem>>, vector<1x512xf32>
    %c0_13 = arith.constant 0 : index
    %c0_14 = arith.constant 0 : index
    %7 = vector.load %arg5[%c0_13, %c0_14] : memref<1x256xf32, #tpu.memory_space<vmem>>, vector<1x256xf32>
    %c0_15 = arith.constant 0 : index
    %c0_16 = arith.constant 0 : index
    %8 = vector.load %arg7[%c0_15, %c0_16] : memref<1x128xf32, #tpu.memory_space<vmem>>, vector<1x128xf32>
    %c0_17 = arith.constant 0 : index
    %c0_18 = arith.constant 0 : index
    %9 = vector.load %arg9[%c0_17, %c0_18] : memref<1x128xf32, #tpu.memory_space<vmem>>, vector<1x128xf32>
    %c0_19 = arith.constant 0 : index
    %c0_20 = arith.constant 0 : index
    %10 = vector.load %arg11[%c0_19, %c0_20] : memref<1x128xf32, #tpu.memory_space<vmem>>, vector<1x128xf32>
    %c0_21 = arith.constant 0 : index
    %c0_22 = arith.constant 0 : index
    %11 = vector.load %arg13[%c0_21, %c0_22] : memref<1x8xf32, #tpu.memory_space<vmem>>, vector<1x8xf32>
    %c0_23 = arith.constant 0 : index
    %c0_24 = arith.constant 0 : index
    %12 = vector.load %arg1[%c0_23, %c0_24] : memref<8x8xf32, #tpu.memory_space<vmem>>, vector<8x8xf32>
    %13 = arith.truncf %12 : vector<8x8xf32> to vector<8x8xbf16>
    %cst = arith.constant dense<0.000000e+00> : vector<8x512xf32>
    %14 = tpu.matmul %13, %0, %cst {dimension_numbers = #tpu.dot_dimension_numbers<[1], [0], [0], [1], [0, 0, 1, 1], [], []>} : vector<8x8xbf16>, vector<8x512xbf16>, vector<8x512xf32> -> vector<8x512xf32>
    %15 = vector.broadcast %6 : vector<1x512xf32> to vector<8x512xf32>
    %16 = arith.addf %14, %15 : vector<8x512xf32>
    %17 = math.tanh %16 : vector<8x512xf32>
    %18 = arith.truncf %17 : vector<8x512xf32> to vector<8x512xbf16>
    %cst_25 = arith.constant dense<0.000000e+00> : vector<8x256xf32>
    %19 = tpu.matmul %18, %1, %cst_25 {dimension_numbers = #tpu.dot_dimension_numbers<[1], [0], [0], [1], [0, 0, 1, 1], [], []>} : vector<8x512xbf16>, vector<512x256xbf16>, vector<8x256xf32> -> vector<8x256xf32>
    %20 = vector.broadcast %7 : vector<1x256xf32> to vector<8x256xf32>
    %21 = arith.addf %19, %20 : vector<8x256xf32>
    %22 = math.tanh %21 : vector<8x256xf32>
    %23 = arith.truncf %22 : vector<8x256xf32> to vector<8x256xbf16>
    %cst_26 = arith.constant dense<0.000000e+00> : vector<8x128xf32>
    %24 = tpu.matmul %23, %2, %cst_26 {dimension_numbers = #tpu.dot_dimension_numbers<[1], [0], [0], [1], [0, 0, 1, 1], [], []>} : vector<8x256xbf16>, vector<256x128xbf16>, vector<8x128xf32> -> vector<8x128xf32>
    %25 = vector.broadcast %8 : vector<1x128xf32> to vector<8x128xf32>
    %26 = arith.addf %24, %25 : vector<8x128xf32>
    %27 = math.tanh %26 : vector<8x128xf32>
    %28 = arith.truncf %27 : vector<8x128xf32> to vector<8x128xbf16>
    %cst_27 = arith.constant dense<0.000000e+00> : vector<8x128xf32>
    %29 = tpu.matmul %28, %3, %cst_27 {dimension_numbers = #tpu.dot_dimension_numbers<[1], [0], [0], [1], [0, 0, 1, 1], [], []>} : vector<8x128xbf16>, vector<128x128xbf16>, vector<8x128xf32> -> vector<8x128xf32>
    %30 = vector.broadcast %9 : vector<1x128xf32> to vector<8x128xf32>
    %31 = arith.addf %29, %30 : vector<8x128xf32>
    %32 = math.tanh %31 : vector<8x128xf32>
    %33 = arith.truncf %32 : vector<8x128xf32> to vector<8x128xbf16>
    %cst_28 = arith.constant dense<0.000000e+00> : vector<8x128xf32>
    %34 = tpu.matmul %33, %4, %cst_28 {dimension_numbers = #tpu.dot_dimension_numbers<[1], [0], [0], [1], [0, 0, 1, 1], [], []>} : vector<8x128xbf16>, vector<128x128xbf16>, vector<8x128xf32> -> vector<8x128xf32>
    %35 = vector.broadcast %10 : vector<1x128xf32> to vector<8x128xf32>
    %36 = arith.addf %34, %35 : vector<8x128xf32>
    %37 = math.tanh %36 : vector<8x128xf32>
    %38 = arith.truncf %37 : vector<8x128xf32> to vector<8x128xbf16>
    %cst_29 = arith.constant dense<0.000000e+00> : vector<8x8xf32>
    %39 = tpu.matmul %38, %5, %cst_29 {dimension_numbers = #tpu.dot_dimension_numbers<[1], [0], [0], [1], [0, 0, 1, 1], [], []>} : vector<8x128xbf16>, vector<128x8xbf16>, vector<8x8xf32> -> vector<8x8xf32>
    %40 = vector.broadcast %11 : vector<1x8xf32> to vector<8x8xf32>
    %41 = arith.addf %39, %40 : vector<8x8xf32>
    %c0_30 = arith.constant 0 : index
    %c0_31 = arith.constant 0 : index
    %42 = vector.load %arg14[%c0_30, %c0_31] : memref<8x8xf32, #tpu.memory_space<vmem>>, vector<8x8xf32>
    tpu.vector_store %arg14[%c0_30, %c0_31], %41 {strides = array<i32>} : memref<8x8xf32, #tpu.memory_space<vmem>>, vector<8x8xf32>,
    return
  }
  func.func @transform_0(%arg0: i32) -> (i32, i32) {
    %c0_i32 = arith.constant 0 : i32
    %c0_i32_0 = arith.constant 0 : i32
    return %arg0, %c0_i32 : i32, i32
  }
  func.func @transform_1(%arg0: i32) -> (i32, i32) {
    %c0_i32 = arith.constant 0 : i32
    %c0_i32_0 = arith.constant 0 : i32
    %c0_i32_1 = arith.constant 0 : i32
    return %c0_i32, %c0_i32_0 : i32, i32
  }
  func.func @transform_2(%arg0: i32) -> (i32, i32) {
    %c0_i32 = arith.constant 0 : i32
    %c0_i32_0 = arith.constant 0 : i32
    %c0_i32_1 = arith.constant 0 : i32
    return %c0_i32, %c0_i32_0 : i32, i32
  }
  func.func @transform_3(%arg0: i32) -> (i32, i32) {
    %c0_i32 = arith.constant 0 : i32
    %c0_i32_0 = arith.constant 0 : i32
    %c0_i32_1 = arith.constant 0 : i32
    return %c0_i32, %c0_i32_0 : i32, i32
  }
  func.func @transform_4(%arg0: i32) -> (i32, i32) {
    %c0_i32 = arith.constant 0 : i32
    %c0_i32_0 = arith.constant 0 : i32
    %c0_i32_1 = arith.constant 0 : i32
    return %c0_i32, %c0_i32_0 : i32, i32
  }
  func.func @transform_5(%arg0: i32) -> (i32, i32) {
    %c0_i32 = arith.constant 0 : i32
    %c0_i32_0 = arith.constant 0 : i32
    %c0_i32_1 = arith.constant 0 : i32
    return %c0_i32, %c0_i32_0 : i32, i32
  }
  func.func @transform_6(%arg0: i32) -> (i32, i32) {
    %c0_i32 = arith.constant 0 : i32
    %c0_i32_0 = arith.constant 0 : i32
    %c0_i32_1 = arith.constant 0 : i32
    return %c0_i32, %c0_i32_0 : i32, i32
  }
  func.func @transform_7(%arg0: i32) -> (i32, i32) {
    %c0_i32 = arith.constant 0 : i32
    %c0_i32_0 = arith.constant 0 : i32
    %c0_i32_1 = arith.constant 0 : i32
    return %c0_i32, %c0_i32_0 : i32, i32
  }
  func.func @transform_8(%arg0: i32) -> (i32, i32) {
    %c0_i32 = arith.constant 0 : i32
    %c0_i32_0 = arith.constant 0 : i32
    %c0_i32_1 = arith.constant 0 : i32
    return %c0_i32, %c0_i32_0 : i32, i32
  }
  func.func @transform_9(%arg0: i32) -> (i32, i32) {
    %c0_i32 = arith.constant 0 : i32
    %c0_i32_0 = arith.constant 0 : i32
    %c0_i32_1 = arith.constant 0 : i32
    return %c0_i32, %c0_i32_0 : i32, i32
  }
  func.func @transform_10(%arg0: i32) -> (i32, i32) {
    %c0_i32 = arith.constant 0 : i32
    %c0_i32_0 = arith.constant 0 : i32
    %c0_i32_1 = arith.constant 0 : i32
    return %c0_i32, %c0_i32_0 : i32, i32
  }
  func.func @transform_11(%arg0: i32) -> (i32, i32) {
    %c0_i32 = arith.constant 0 : i32
    %c0_i32_0 = arith.constant 0 : i32
    %c0_i32_1 = arith.constant 0 : i32
    return %c0_i32, %c0_i32_0 : i32, i32
  }
  func.func @transform_12(%arg0: i32) -> (i32, i32) {
    %c0_i32 = arith.constant 0 : i32
    %c0_i32_0 = arith.constant 0 : i32
    %c0_i32_1 = arith.constant 0 : i32
    return %c0_i32, %c0_i32_0 : i32, i32
  }
  func.func @transform_13(%arg0: i32) -> (i32, i32) {
    %c0_i32 = arith.constant 0 : i32
    %c0_i32_0 = arith.constant 0 : i32
    return %arg0, %c0_i32 : i32, i32
  }
}

</mosaic_0001>

<llo_original>
// kernel: tpu_custom_call.1
$region0: #{tpu_custom_call.1}
  #allocation0 [shape = 'u32[]', space=smem, size = 0x4, offset = 0x4, fixed_abs, tag = 'smem constant byte address 0x4 - core index']
  #allocation1 [shape = 'u32[144,128]{1,0:T(1,128)}', space=vmem, size = 0x12000, scoped, tag = 'internal scratch']
  %s0 = inlined_call_operand.hbm [shape: f32[8,8], index: 0, kind: input, shape index: {}]
  %s1 = inlined_call_operand.vmem [shape: bf16[8,512], index: 1, kind: input, shape index: {}]
  %s2 = inlined_call_operand.hbm [shape: f32[1,512], index: 2, kind: input, shape index: {}]
  %s3 = inlined_call_operand.hbm [shape: bf16[512,256], index: 3, kind: input, shape index: {}]
  %s4 = inlined_call_operand.hbm [shape: f32[1,256], index: 4, kind: input, shape index: {}]
  %s5 = inlined_call_operand.hbm [shape: bf16[256,128], index: 5, kind: input, shape index: {}]
  %s6 = inlined_call_operand.hbm [shape: f32[1,128], index: 6, kind: input, shape index: {}]
  %s7 = inlined_call_operand.vmem [shape: bf16[128,128], index: 7, kind: input, shape index: {}]
  %s8 = inlined_call_operand.hbm [shape: f32[1,128], index: 8, kind: input, shape index: {}]
  %s9 = inlined_call_operand.hbm [shape: bf16[128,128], index: 9, kind: input, shape index: {}]
  %s10 = inlined_call_operand.vmem [shape: f32[1,128], index: 10, kind: input, shape index: {}]
  %s11 = inlined_call_operand.vmem [shape: bf16[128,8], index: 11, kind: input, shape index: {}]
  %s12 = inlined_call_operand.vmem [shape: f32[1,8], index: 12, kind: input, shape index: {}]
  %s13 = inlined_call_operand.hbm [shape: f32[8,8], index: 13, kind: output, shape index: {}]
  %s14 = sld [smem:[#allocation0]]
  $region94: #{tpu_custom_call.1} parent=0
    _
  %s16 = ssub.s32 1, %s14
  %s17 = scalar_select 0, %s16, %s14
  $region1: #{tpu_custom_call.1} parent=0
    #allocation2 [shape = 'u8[4096]{0}', space=vmem, size = 0x1000, scoped, tag = 'input window, operand 0, single buffered']
    #allocation3 [shape = 's32[1]{0}', space=sflag, size = 0x4, scoped, tag = 'scoped memory for tpu_custom_call.1']
    #allocation4 [shape = 's32[1]{0}', space=sflag, size = 0x4, scoped, tag = 'scoped memory for tpu_custom_call.1']
    #allocation5 [shape = 'u8[2048]{0}', space=vmem, size = 0x800, scoped, tag = 'input window, operand 2, single buffered']
    #allocation6 [shape = 's32[1]{0}', space=sflag, size = 0x4, scoped, tag = 'scoped memory for tpu_custom_call.1']
    #allocation7 [shape = 'u8[262144]{0}', space=vmem, size = 0x40000, scoped, tag = 'input window, operand 3, single buffered']
    #allocation8 [shape = 'u8[1024]{0}', space=vmem, size = 0x400, scoped, tag = 'input window, operand 4, single buffered']
    #allocation9 [shape = 's32[1]{0}', space=sflag, size = 0x4, scoped, tag = 'scoped memory for tpu_custom_call.1']
    #allocation10 [shape = 'u8[65536]{0}', space=vmem, size = 0x10000, scoped, tag = 'input window, operand 5, single buffered']
    #allocation11 [shape = 'u8[512]{0}', space=vmem, size = 0x400, scoped, tag = 'input window, operand 6, single buffered']
    #allocation12 [shape = 's32[1]{0}', space=sflag, size = 0x4, scoped, tag = 'scoped memory for tpu_custom_call.1']
    #allocation13 [shape = 'u8[512]{0}', space=vmem, size = 0x400, scoped, tag = 'input window, operand 8, single buffered']
    #allocation14 [shape = 'u8[32768]{0}', space=vmem, size = 0x8000, scoped, tag = 'input window, operand 9, single buffered']
    #allocation15 [shape = 's32[1]{0}', space=sflag, size = 0x4, scoped, tag = 'scoped memory for tpu_custom_call.1']
    #allocation16 [shape = 'u8[4096]{0}', space=vmem, size = 0x1000, scoped, tag = 'output window, operand 0, single buffered']
    %18 = vsyncpa [#allocation3], 0
    %19 = vsyncpa [#allocation6], 0
    %20 = vsyncpa [#allocation9], 0
    %21 = vsyncpa [#allocation12], 0
    %22 = vsyncpa [#allocation15], 0
    %23 = vsyncpa [#allocation4], 0
    // Predicated region
    $region2: #{tpu_custom_call.1} parent=1 // pred_check
      _
    $region3: #{tpu_custom_call.1} parent=1 // pred_check_branch
      %25 = sbr.rel (0) target = $region5
    $region4: #{tpu_custom_call.1} parent=1 // pred_region
      %s27 = ssub.s32 128, 128
      %28 = vsyncadd [#allocation3], %s27
      %s30 = sshll.u32 [#allocation2], 4
      %s31 = int_to_ptr.vmem [resolvable:$true] %s30
      %33 = dma.hbm_to_vmem [thread:$0]  %s0, 128, %s31, [#allocation3]
    $region5: #{tpu_custom_call.1} parent=1 // pred_fallthru
      _
    // Predicated region
    $region6: #{tpu_custom_call.1} parent=1 // pred_check
      _
    $region7: #{tpu_custom_call.1} parent=1 // pred_check_branch
      %35 = sbr.rel (0) target = $region9
    $region8: #{tpu_custom_call.1} parent=1 // pred_region
      _
    $region9: #{tpu_custom_call.1} parent=1 // pred_fallthru
      _
    // Predicated region
    $region10: #{tpu_custom_call.1} parent=1 // pred_check
      _
    $region11: #{tpu_custom_call.1} parent=1 // pred_check_branch
      %37 = sbr.rel (0) target = $region13
    $region12: #{tpu_custom_call.1} parent=1 // pred_region
      %s39 = ssub.s32 64, 64
      %40 = vsyncadd [#allocation6], %s39
      %s42 = sshll.u32 [#allocation5], 4
      %s43 = int_to_ptr.vmem [resolvable:$true] %s42
      %45 = dma.hbm_to_vmem [thread:$0]  %s2, 64, %s43, [#allocation6]
    $region13: #{tpu_custom_call.1} parent=1 // pred_fallthru
      _
    // Predicated region
    $region14: #{tpu_custom_call.1} parent=1 // pred_check
      _
    $region15: #{tpu_custom_call.1} parent=1 // pred_check_branch
      %47 = sbr.rel (0) target = $region17
    $region16: #{tpu_custom_call.1} parent=1 // pred_region
      %s49 = ssub.s32 8192, 8192
      %50 = vsyncadd [#allocation6], %s49
      %s51 = sshll.u32 [#allocation7], 4
      %s52 = int_to_ptr.vmem [resolvable:$true] %s51
      %57 = dma.hbm_to_vmem [thread:$0]  %s3, 8192, %s52, [#allocation6], 128, 128, 8
    $region17: #{tpu_custom_call.1} parent=1 // pred_fallthru
      _
    // Predicated region
    $region18: #{tpu_custom_call.1} parent=1 // pred_check
      _
    $region19: #{tpu_custom_call.1} parent=1 // pred_check_branch
      %59 = sbr.rel (0) target = $region21
    $region20: #{tpu_custom_call.1} parent=1 // pred_region
      %s61 = ssub.s32 32, 32
      %62 = vsyncadd [#allocation9], %s61
      %s64 = sshll.u32 [#allocation8], 4
      %s65 = int_to_ptr.vmem [resolvable:$true] %s64
      %67 = dma.hbm_to_vmem [thread:$0]  %s4, 32, %s65, [#allocation9]
    $region21: #{tpu_custom_call.1} parent=1 // pred_fallthru
      _
    // Predicated region
    $region22: #{tpu_custom_call.1} parent=1 // pred_check
      _
    $region23: #{tpu_custom_call.1} parent=1 // pred_check_branch
      %69 = sbr.rel (0) target = $region25
    $region24: #{tpu_custom_call.1} parent=1 // pred_region
      %s71 = ssub.s32 2048, 2048
      %72 = vsyncadd [#allocation9], %s71
      %s73 = sshll.u32 [#allocation10], 4
      %s74 = int_to_ptr.vmem [resolvable:$true] %s73
      %79 = dma.hbm_to_vmem [thread:$0]  %s5, 2048, %s74, [#allocation9], 64, 64, 4
    $region25: #{tpu_custom_call.1} parent=1 // pred_fallthru
      _
    // Predicated region
    $region26: #{tpu_custom_call.1} parent=1 // pred_check
      _
    $region27: #{tpu_custom_call.1} parent=1 // pred_check_branch
      %81 = sbr.rel (0) target = $region29
    $region28: #{tpu_custom_call.1} parent=1 // pred_region
      %s83 = ssub.s32 16, 16
      %84 = vsyncadd [#allocation12], %s83
      %s86 = sshll.u32 [#allocation11], 4
      %s87 = int_to_ptr.vmem [resolvable:$true] %s86
      %89 = dma.hbm_to_vmem [thread:$0]  %s6, 16, %s87, [#allocation12]
    $region29: #{tpu_custom_call.1} parent=1 // pred_fallthru
      _
    // Predicated region
    $region30: #{tpu_custom_call.1} parent=1 // pred_check
      _
    $region31: #{tpu_custom_call.1} parent=1 // pred_check_branch
      %91 = sbr.rel (0) target = $region33
    $region32: #{tpu_custom_call.1} parent=1 // pred_region
      _
    $region33: #{tpu_custom_call.1} parent=1 // pred_fallthru
      _
    // Predicated region
    $region34: #{tpu_custom_call.1} parent=1 // pred_check
      _
    $region35: #{tpu_custom_call.1} parent=1 // pred_check_branch
      %93 = sbr.rel (0) target = $region37
    $region36: #{tpu_custom_call.1} parent=1 // pred_region
      %s95 = ssub.s32 16, 16
      %96 = vsyncadd [#allocation12], %s95
      %s98 = sshll.u32 [#allocation13], 4
      %s99 = int_to_ptr.vmem [resolvable:$true] %s98
      %101 = dma.hbm_to_vmem [thread:$0]  %s8, 16, %s99, [#allocation12]
    $region37: #{tpu_custom_call.1} parent=1 // pred_fallthru
      _
    // Predicated region
    $region38: #{tpu_custom_call.1} parent=1 // pred_check
      _
    $region39: #{tpu_custom_call.1} parent=1 // pred_check_branch
      %103 = sbr.rel (0) target = $region41
    $region40: #{tpu_custom_call.1} parent=1 // pred_region
      %s105 = ssub.s32 1024, 1024
      %106 = vsyncadd [#allocation15], %s105
      %s107 = sshll.u32 [#allocation14], 4
      %s108 = int_to_ptr.vmem [resolvable:$true] %s107
      %113 = dma.hbm_to_vmem [thread:$0]  %s9, 1024, %s108, [#allocation15], 64, 64, 4
    $region41: #{tpu_custom_call.1} parent=1 // pred_fallthru
      _
    // Predicated region
    $region42: #{tpu_custom_call.1} parent=1 // pred_check
      _
    $region43: #{tpu_custom_call.1} parent=1 // pred_check_branch
      %115 = sbr.rel (0) target = $region45
    $region44: #{tpu_custom_call.1} parent=1 // pred_region
      _
    $region45: #{tpu_custom_call.1} parent=1 // pred_fallthru
      _
    // Predicated region
    $region46: #{tpu_custom_call.1} parent=1 // pred_check
      _
    $region47: #{tpu_custom_call.1} parent=1 // pred_check_branch
      %117 = sbr.rel (0) target = $region49
    $region48: #{tpu_custom_call.1} parent=1 // pred_region
      _
    $region49: #{tpu_custom_call.1} parent=1 // pred_fallthru
      _
    // Predicated region
    $region50: #{tpu_custom_call.1} parent=1 // pred_check
      _
    $region51: #{tpu_custom_call.1} parent=1 // pred_check_branch
      %119 = sbr.rel (0) target = $region53
    $region52: #{tpu_custom_call.1} parent=1 // pred_region
      _
    $region53: #{tpu_custom_call.1} parent=1 // pred_fallthru
      _
    // Predicated region
    $region54: #{tpu_custom_call.1} parent=1 // pred_check
      _
    $region55: #{tpu_custom_call.1} parent=1 // pred_check_branch
      %121 = sbr.rel (0) target = $region57
    $region56: #{tpu_custom_call.1} parent=1 // pred_region
      %122 = dma.done [#allocation3], 128
    $region57: #{tpu_custom_call.1} parent=1 // pred_fallthru
      _
    // Predicated region
    $region58: #{tpu_custom_call.1} parent=1 // pred_check
      _
    $region59: #{tpu_custom_call.1} parent=1 // pred_check_branch
      %124 = sbr.rel (0) target = $region61
    $region60: #{tpu_custom_call.1} parent=1 // pred_region
      %125 = dma.done [#allocation6], 64
    $region61: #{tpu_custom_call.1} parent=1 // pred_fallthru
      _
    // Predicated region
    $region62: #{tpu_custom_call.1} parent=1 // pred_check
      _
    $region63: #{tpu_custom_call.1} parent=1 // pred_check_branch
      %127 = sbr.rel (0) target = $region65
    $region64: #{tpu_custom_call.1} parent=1 // pred_region
      %128 = dma.done [#allocation6], 8192
    $region65: #{tpu_custom_call.1} parent=1 // pred_fallthru
      _
    // Predicated region
    $region66: #{tpu_custom_call.1} parent=1 // pred_check
      _
    $region67: #{tpu_custom_call.1} parent=1 // pred_check_branch
      %130 = sbr.rel (0) target = $region69
    $region68: #{tpu_custom_call.1} parent=1 // pred_region
      %131 = dma.done [#allocation9], 32
    $region69: #{tpu_custom_call.1} parent=1 // pred_fallthru
      _
    // Predicated region
    $region70: #{tpu_custom_call.1} parent=1 // pred_check
      _
    $region71: #{tpu_custom_call.1} parent=1 // pred_check_branch
      %133 = sbr.rel (0) target = $region73
    $region72: #{tpu_custom_call.1} parent=1 // pred_region
      %134 = dma.done [#allocation9], 2048
    $region73: #{tpu_custom_call.1} parent=1 // pred_fallthru
      _
    // Predicated region
    $region74: #{tpu_custom_call.1} parent=1 // pred_check
      _
    $region75: #{tpu_custom_call.1} parent=1 // pred_check_branch
      %136 = sbr.rel (0) target = $region77
    $region76: #{tpu_custom_call.1} parent=1 // pred_region
      %137 = dma.done [#allocation12], 16
    $region77: #{tpu_custom_call.1} parent=1 // pred_fallthru
      _
    // Predicated region
    $region78: #{tpu_custom_call.1} parent=1 // pred_check
      _
    $region79: #{tpu_custom_call.1} parent=1 // pred_check_branch
      %139 = sbr.rel (0) target = $region81
    $region80: #{tpu_custom_call.1} parent=1 // pred_region
      %140 = dma.done [#allocation12], 16
    $region81: #{tpu_custom_call.1} parent=1 // pred_fallthru
      _
    // Predicated region
    $region82: #{tpu_custom_call.1} parent=1 // pred_check
      _
    $region83: #{tpu_custom_call.1} parent=1 // pred_check_branch
      %142 = sbr.rel (0) target = $region85
    $region84: #{tpu_custom_call.1} parent=1 // pred_region
      %143 = dma.done [#allocation15], 1024
    $region85: #{tpu_custom_call.1} parent=1 // pred_fallthru
      _
    %v145 = vld [vmem:[%s1] sm:$0xff]
    %v146 = vld [vmem:[%s1 + $0x8] sm:$0xff]
    %v147 = vld [vmem:[#allocation7] sm:$0xff]
    %v148 = vld [vmem:[#allocation7 + $0x8] sm:$0xff]
    %v149 = vld [vmem:[#allocation7 + $0x10] sm:$0xff]
    %v150 = vld [vmem:[#allocation7 + $0x18] sm:$0xff]
    %v151 = vld [vmem:[#allocation7 + $0x20] sm:$0xff]
    %v152 = vld [vmem:[#allocation7 + $0x28] sm:$0xff]
    %v153 = vld [vmem:[#allocation7 + $0x30] sm:$0xff]
    %v154 = vld [vmem:[#allocation7 + $0x38] sm:$0xff]
    %v155 = vld [vmem:[#allocation7 + $0x40] sm:$0xff]
    %v156 = vld [vmem:[#allocation7 + $0x48] sm:$0xff]
    %v157 = vld [vmem:[#allocation7 + $0x50] sm:$0xff]
    %v158 = vld [vmem:[#allocation7 + $0x58] sm:$0xff]
    %v159 = vld [vmem:[#allocation7 + $0x60] sm:$0xff]
    %v160 = vld [vmem:[#allocation7 + $0x68] sm:$0xff]
    %v161 = vld [vmem:[#allocation7 + $0x70] sm:$0xff]
    %v162 = vld [vmem:[#allocation7 + $0x78] sm:$0xff]
    %v163 = vld [vmem:[#allocation7 + $0x80] sm:$0xff]
    %v164 = vld [vmem:[#allocation7 + $0x88] sm:$0xff]
    %v165 = vld [vmem:[#allocation7 + $0x90] sm:$0xff]
    %v166 = vld [vmem:[#allocation7 + $0x98] sm:$0xff]
    %v167 = vld [vmem:[#allocation7 + $0xa0] sm:$0xff]
    %v168 = vld [vmem:[#allocation7 + $0xa8] sm:$0xff]
    %v169 = vld [vmem:[#allocation7 + $0xb0] sm:$0xff]
    %v170 = vld [vmem:[#allocation7 + $0xb8] sm:$0xff]
    %v171 = vld [vmem:[#allocation7 + $0xc0] sm:$0xff]
    %v172 = vld [vmem:[#allocation7 + $0xc8] sm:$0xff]
    %v173 = vld [vmem:[#allocation7 + $0xd0] sm:$0xff]
    %v174 = vld [vmem:[#allocation7 + $0xd8] sm:$0xff]
    %v175 = vld [vmem:[#allocation7 + $0xe0] sm:$0xff]
    %v176 = vld [vmem:[#allocation7 + $0xe8] sm:$0xff]
    %v177 = vld [vmem:[#allocation7 + $0xf0] sm:$0xff]
    %v178 = vld [vmem:[#allocation7 + $0xf8] sm:$0xff]
    %v179 = vld [vmem:[#allocation7 + $0x100] sm:$0xff]
    %v180 = vld [vmem:[#allocation7 + $0x108] sm:$0xff]
    %v181 = vld [vmem:[#allocation7 + $0x110] sm:$0xff]
    %v182 = vld [vmem:[#allocation7 + $0x118] sm:$0xff]
    %v183 = vld [vmem:[#allocation7 + $0x120] sm:$0xff]
    %v184 = vld [vmem:[#allocation7 + $0x128] sm:$0xff]
    %v185 = vld [vmem:[#allocation7 + $0x130] sm:$0xff]
    %v186 = vld [vmem:[#allocation7 + $0x138] sm:$0xff]
    %v187 = vld [vmem:[#allocation7 + $0x140] sm:$0xff]
    %v188 = vld [vmem:[#allocation7 + $0x148] sm:$0xff]
    %v189 = vld [vmem:[#allocation7 + $0x150] sm:$0xff]
    %v190 = vld [vmem:[#allocation7 + $0x158] sm:$0xff]
    %v191 = vld [vmem:[#allocation7 + $0x160] sm:$0xff]
    %v192 = vld [vmem:[#allocation7 + $0x168] sm:$0xff]
    %v193 = vld [vmem:[#allocation7 + $0x170] sm:$0xff]
    %v194 = vld [vmem:[#allocation7 + $0x178] sm:$0xff]
    %v195 = vld [vmem:[#allocation7 + $0x180] sm:$0xff]
    %v196 = vld [vmem:[#allocation7 + $0x188] sm:$0xff]
    %v197 = vld [vmem:[#allocation7 + $0x190] sm:$0xff]
    %v198 = vld [vmem:[#allocation7 + $0x198] sm:$0xff]
    %v199 = vld [vmem:[#allocation7 + $0x1a0] sm:$0xff]
    %v200 = vld [vmem:[#allocation7 + $0x1a8] sm:$0xff]
    %v201 = vld [vmem:[#allocation7 + $0x1b0] sm:$0xff]
    %v202 = vld [vmem:[#allocation7 + $0x1b8] sm:$0xff]
    %v203 = vld [vmem:[#allocation7 + $0x1c0] sm:$0xff]
    %v204 = vld [vmem:[#allocation7 + $0x1c8] sm:$0xff]
    %v205 = vld [vmem:[#allocation7 + $0x1d0] sm:$0xff]
    %v206 = vld [vmem:[#allocation7 + $0x1d8] sm:$0xff]
    %v207 = vld [vmem:[#allocation7 + $0x1e0] sm:$0xff]
    %v208 = vld [vmem:[#allocation7 + $0x1e8] sm:$0xff]
    %v209 = vld [vmem:[#allocation7 + $0x1f0] sm:$0xff]
    %v210 = vld [vmem:[#allocation7 + $0x1f8] sm:$0xff]
    %v211 = vld [vmem:[#allocation10] sm:$0xf]
    %v212 = vld [vmem:[#allocation10 + $0x4] sm:$0xf]
    %v213 = vld [vmem:[#allocation10 + $0x8] sm:$0xf]
    %v214 = vld [vmem:[#allocation10 + $0xc] sm:$0xf]
    %v215 = vld [vmem:[#allocation10 + $0x10] sm:$0xf]
    %v216 = vld [vmem:[#allocation10 + $0x14] sm:$0xf]
    %v217 = vld [vmem:[#allocation10 + $0x18] sm:$0xf]
    %v218 = vld [vmem:[#allocation10 + $0x1c] sm:$0xf]
    %v219 = vld [vmem:[#allocation10 + $0x20] sm:$0xf]
    %v220 = vld [vmem:[#allocation10 + $0x24] sm:$0xf]
    %v221 = vld [vmem:[#allocation10 + $0x28] sm:$0xf]
    %v222 = vld [vmem:[#allocation10 + $0x2c] sm:$0xf]
    %v223 = vld [vmem:[#allocation10 + $0x30] sm:$0xf]
    %v224 = vld [vmem:[#allocation10 + $0x34] sm:$0xf]
    %v225 = vld [vmem:[#allocation10 + $0x38] sm:$0xf]
    %v226 = vld [vmem:[#allocation10 + $0x3c] sm:$0xf]
    %v227 = vld [vmem:[#allocation10 + $0x40] sm:$0xf]
    %v228 = vld [vmem:[#allocation10 + $0x44] sm:$0xf]
    %v229 = vld [vmem:[#allocation10 + $0x48] sm:$0xf]
    %v230 = vld [vmem:[#allocation10 + $0x4c] sm:$0xf]
    %v231 = vld [vmem:[#allocation10 + $0x50] sm:$0xf]
    %v232 = vld [vmem:[#allocation10 + $0x54] sm:$0xf]
    %v233 = vld [vmem:[#allocation10 + $0x58] sm:$0xf]
    %v234 = vld [vmem:[#allocation10 + $0x5c] sm:$0xf]
    %v235 = vld [vmem:[#allocation10 + $0x60] sm:$0xf]
    %v236 = vld [vmem:[#allocation10 + $0x64] sm:$0xf]
    %v237 = vld [vmem:[#allocation10 + $0x68] sm:$0xf]
    %v238 = vld [vmem:[#allocation10 + $0x6c] sm:$0xf]
    %v239 = vld [vmem:[#allocation10 + $0x70] sm:$0xf]
    %v240 = vld [vmem:[#allocation10 + $0x74] sm:$0xf]
    %v241 = vld [vmem:[#allocation10 + $0x78] sm:$0xf]
    %v242 = vld [vmem:[#allocation10 + $0x7c] sm:$0xf]
    %v243 = vld [vmem:[%s7] sm:$0xf]
    %v244 = vld [vmem:[%s7 + $0x4] sm:$0xf]
    %v245 = vld [vmem:[%s7 + $0x8] sm:$0xf]
    %v246 = vld [vmem:[%s7 + $0xc] sm:$0xf]
    %v247 = vld [vmem:[%s7 + $0x10] sm:$0xf]
    %v248 = vld [vmem:[%s7 + $0x14] sm:$0xf]
    %v249 = vld [vmem:[%s7 + $0x18] sm:$0xf]
    %v250 = vld [vmem:[%s7 + $0x1c] sm:$0xf]
    %v251 = vld [vmem:[%s7 + $0x20] sm:$0xf]
    %v252 = vld [vmem:[%s7 + $0x24] sm:$0xf]
    %v253 = vld [vmem:[%s7 + $0x28] sm:$0xf]
    %v254 = vld [vmem:[%s7 + $0x2c] sm:$0xf]
    %v255 = vld [vmem:[%s7 + $0x30] sm:$0xf]
    %v256 = vld [vmem:[%s7 + $0x34] sm:$0xf]
    %v257 = vld [vmem:[%s7 + $0x38] sm:$0xf]
    %v258 = vld [vmem:[%s7 + $0x3c] sm:$0xf]
    %v259 = vld [vmem:[#allocation14] sm:$0xf]
    %v260 = vld [vmem:[#allocation14 + $0x4] sm:$0xf]
    %v261 = vld [vmem:[#allocation14 + $0x8] sm:$0xf]
    %v262 = vld [vmem:[#allocation14 + $0xc] sm:$0xf]
    %v263 = vld [vmem:[#allocation14 + $0x10] sm:$0xf]
    %v264 = vld [vmem:[#allocation14 + $0x14] sm:$0xf]
    %v265 = vld [vmem:[#allocation14 + $0x18] sm:$0xf]
    %v266 = vld [vmem:[#allocation14 + $0x1c] sm:$0xf]
    %v267 = vld [vmem:[#allocation14 + $0x20] sm:$0xf]
    %v268 = vld [vmem:[#allocation14 + $0x24] sm:$0xf]
    %v269 = vld [vmem:[#allocation14 + $0x28] sm:$0xf]
    %v270 = vld [vmem:[#allocation14 + $0x2c] sm:$0xf]
    %v271 = vld [vmem:[#allocation14 + $0x30] sm:$0xf]
    %v272 = vld [vmem:[#allocation14 + $0x34] sm:$0xf]
    %v273 = vld [vmem:[#allocation14 + $0x38] sm:$0xf]
    %v274 = vld [vmem:[#allocation14 + $0x3c] sm:$0xf]
    %v275 = vld [vmem:[%s11] sm:$0xf]
    %v276 = vld [vmem:[%s11 + $0x4] sm:$0xf]
    %v277 = vld [vmem:[%s11 + $0x8] sm:$0xf]
    %v278 = vld [vmem:[%s11 + $0xc] sm:$0xf]
    %v279 = vld [vmem:[%s11 + $0x10] sm:$0xf]
    %v280 = vld [vmem:[%s11 + $0x14] sm:$0xf]
    %v281 = vld [vmem:[%s11 + $0x18] sm:$0xf]
    %v282 = vld [vmem:[%s11 + $0x1c] sm:$0xf]
    %v283 = vld [vmem:[%s11 + $0x20] sm:$0xf]
    %v284 = vld [vmem:[%s11 + $0x24] sm:$0xf]
    %v285 = vld [vmem:[%s11 + $0x28] sm:$0xf]
    %v286 = vld [vmem:[%s11 + $0x2c] sm:$0xf]
    %v287 = vld [vmem:[%s11 + $0x30] sm:$0xf]
    %v288 = vld [vmem:[%s11 + $0x34] sm:$0xf]
    %v289 = vld [vmem:[%s11 + $0x38] sm:$0xf]
    %v290 = vld [vmem:[%s11 + $0x3c] sm:$0xf]
    %v291 = vld [vmem:[#allocation5] sm:$0xf]
    %v292 = vld [vmem:[#allocation8] sm:$0x3]
    %v293 = vld [vmem:[#allocation11] sm:$0x1]
    %v294 = vld [vmem:[#allocation13] sm:$0x1]
    %v295 = vld [vmem:[%s10] sm:$0x1]
    %v296 = vld [vmem:[%s12] sm:$0x1]
    %v297 = vld [vmem:[#allocation2] sm:$0xff]
    %v298 = vpack.c.bf16 %v297, %v297
    %v300 = vlaneseq
    %v301 = vshrl.u32 %v300, 7
    %v302 = vsub.s32 0, %v301
    %v303 = vrot.slane %v291, %v302
    %v304 = vlaneseq
    %v305 = vshrl.u32 %v304, 7
    %v306 = vsub.s32 1, %v305
    %v307 = vrot.slane %v291, %v306
    %v308 = vlaneseq
    %v309 = vshrl.u32 %v308, 7
    %v310 = vsub.s32 2, %v309
    %v311 = vrot.slane %v291, %v310
    %v312 = vlaneseq
    %v313 = vshrl.u32 %v312, 7
    %v314 = vsub.s32 3, %v313
    %v315 = vrot.slane %v291, %v314
    %v322 = vunpack.c.l.b16 %v145
    %v323 = vunpack.c.h.b16 %v145
    %v324 = vunpack.c.l.b16 %v146
    %v325 = vunpack.c.h.b16 %v146
    %v326 = vpack.c.b16 %v322, %v322
    %v327 = vpack.c.b16 %v323, %v323
    %v328 = vpack.c.b16 %v324, %v324
    %v329 = vpack.c.b16 %v325, %v325
    %vm330 = vcmask 64512
    %v332 = vsel %vm330, %v298, 0
    %vm334 = vcmask 1043456
    %v336 = vsel %vm334, %v326, 0
    %v339 = vsel %vm334, %v327, 0
    %v342 = vsel %vm334, %v328, 0
    %v345 = vsel %vm334, %v329, 0
    %347 = vmatprep.subr.bf16.mxu0 0
    %348 = vmatpush1.bf16.msra.mxu0 0
    %349 = vmatprep.subr.bf16.mxu0 0
    %350 = vmatpush1.bf16.msra.mxu0 0
    %351 = vmatprep.subr.bf16.mxu0 0
    %352 = vmatpush1.bf16.msra.mxu0 0
    %353 = vmatprep.subr.bf16.mxu0 0
    %354 = vmatpush1.bf16.msra.mxu0 0
    %355 = vmatprep.subr.bf16.mxu0 0
    %356 = vmatpush1.bf16.msra.mxu0 0
    %357 = vmatprep.subr.bf16.mxu0 0
    %358 = vmatpush1.bf16.msra.mxu0 0
    %359 = vmatprep.subr.bf16.mxu0 0
    %360 = vmatpush1.bf16.msra.mxu0 0
    %361 = vmatprep.subr.bf16.mxu0 %v339
    %362 = vmatpush1.bf16.msra.mxu0 %v336
    %363 = vmatprep.subr.bf16.mxu0 0
    %364 = vmatpush2.bf16.msra.mxu0 0
    %365 = vmatprep.subr.bf16.mxu0 0
    %366 = vmatpush2.bf16.msra.mxu0 0
    %367 = vmatprep.subr.bf16.mxu0 0
    %368 = vmatpush2.bf16.msra.mxu0 0
    %369 = vmatprep.subr.bf16.mxu0 0
    %370 = vmatpush2.bf16.msra.mxu0 0
    %371 = vmatprep.subr.bf16.mxu0 0
    %372 = vmatpush2.bf16.msra.mxu0 0
    %373 = vmatprep.subr.bf16.mxu0 0
    %374 = vmatpush2.bf16.msra.mxu0 0
    %375 = vmatprep.subr.bf16.mxu0 0
    %376 = vmatpush2.bf16.msra.mxu0 0
    %377 = vmatprep.subr.bf16.mxu0 0
    %378 = vmatpush2.bf16.msra.mxu0 0
    %379 = vmatprep.mubr.bf16.mxu0 0
    %380 = vmatmul.mubr.bf16.gmra.mxu0 %v332
    %v381 = vpop.f32.mrf.mxu0
    %v382 = vadd.f32 %v303, %v381
    %v383 = vpop.f32.mrf.mxu0
    %v384 = vadd.f32 %v307, %v383
    %v385 = vpop.f32.mrf.mxu0
    %v386 = vpop.f32.mrf.mxu0
    %387 = vdwg.mxu0
    %388 = vmatprep.subr.bf16.mxu0 0
    %389 = vmatpush1.bf16.msra.mxu0 0
    %390 = vmatprep.subr.bf16.mxu0 0
    %391 = vmatpush1.bf16.msra.mxu0 0
    %392 = vmatprep.subr.bf16.mxu0 0
    %393 = vmatpush1.bf16.msra.mxu0 0
    %394 = vmatprep.subr.bf16.mxu0 0
    %395 = vmatpush1.bf16.msra.mxu0 0
    %396 = vmatprep.subr.bf16.mxu0 0
    %397 = vmatpush1.bf16.msra.mxu0 0
    %398 = vmatprep.subr.bf16.mxu0 0
    %399 = vmatpush1.bf16.msra.mxu0 0
    %400 = vmatprep.subr.bf16.mxu0 0
    %401 = vmatpush1.bf16.msra.mxu0 0
    %402 = vmatprep.subr.bf16.mxu0 %v345
    %403 = vmatpush1.bf16.msra.mxu0 %v342
    %404 = vmatprep.subr.bf16.mxu0 0
    %405 = vmatpush2.bf16.msra.mxu0 0
    %406 = vmatprep.subr.bf16.mxu0 0
    %407 = vmatpush2.bf16.msra.mxu0 0
    %408 = vmatprep.subr.bf16.mxu0 0
    %409 = vmatpush2.bf16.msra.mxu0 0
    %410 = vmatprep.subr.bf16.mxu0 0
    %411 = vmatpush2.bf16.msra.mxu0 0
    %412 = vmatprep.subr.bf16.mxu0 0
    %413 = vmatpush2.bf16.msra.mxu0 0
    %414 = vmatprep.subr.bf16.mxu0 0
    %415 = vmatpush2.bf16.msra.mxu0 0
    %416 = vmatprep.subr.bf16.mxu0 0
    %417 = vmatpush2.bf16.msra.mxu0 0
    %418 = vmatprep.subr.bf16.mxu0 0
    %419 = vmatpush2.bf16.msra.mxu0 0
    %420 = vmatprep.mubr.bf16.mxu0 0
    %421 = vmatmul.mubr.bf16.gmra.mxu0 %v332
    %v422 = vpop.f32.mrf.mxu0
    %v423 = vadd.f32 %v311, %v422
    %v424 = vpop.f32.mrf.mxu0
    %v425 = vadd.f32 %v315, %v424
    %v426 = vpop.f32.mrf.mxu0
    %v427 = vpop.f32.mrf.mxu0
    %428 = vdwg.mxu0
    %v429 = vtanh.pop %v382
    %v430 = vtanh.pop %v384
    %v431 = vtanh.pop %v423
    %v432 = vtanh.pop %v425
    %v433 = vpack.c.bf16 %v429, %v429
    %v434 = vpack.c.bf16 %v430, %v430
    %v435 = vpack.c.bf16 %v431, %v431
    %v436 = vpack.c.bf16 %v432, %v432
    %v438 = vlaneseq
    %v439 = vshrl.u32 %v438, 7
    %v440 = vsub.s32 0, %v439
    %v441 = vrot.slane %v292, %v440
    %v442 = vlaneseq
    %v443 = vshrl.u32 %v442, 7
    %v444 = vsub.s32 1, %v443
    %v445 = vrot.slane %v292, %v444
    %v512 = vunpack.c.l.b16 %v147
    %v513 = vunpack.c.h.b16 %v147
    %v514 = vunpack.c.l.b16 %v148
    %v515 = vunpack.c.h.b16 %v148
    %v516 = vunpack.c.l.b16 %v149
    %v517 = vunpack.c.h.b16 %v149
    %v518 = vunpack.c.l.b16 %v150
    %v519 = vunpack.c.h.b16 %v150
    %v520 = vunpack.c.l.b16 %v151
    %v521 = vunpack.c.h.b16 %v151
    %v522 = vunpack.c.l.b16 %v152
    %v523 = vunpack.c.h.b16 %v152
    %v524 = vunpack.c.l.b16 %v153
    %v525 = vunpack.c.h.b16 %v153
    %v526 = vunpack.c.l.b16 %v154
    %v527 = vunpack.c.h.b16 %v154
    %v528 = vunpack.c.l.b16 %v155
    %v529 = vunpack.c.h.b16 %v155
    %v530 = vunpack.c.l.b16 %v156
    %v531 = vunpack.c.h.b16 %v156
    %v532 = vunpack.c.l.b16 %v157
    %v533 = vunpack.c.h.b16 %v157
    %v534 = vunpack.c.l.b16 %v158
    %v535 = vunpack.c.h.b16 %v158
    %v536 = vunpack.c.l.b16 %v159
    %v537 = vunpack.c.h.b16 %v159
    %v538 = vunpack.c.l.b16 %v160
    %v539 = vunpack.c.h.b16 %v160
    %v540 = vunpack.c.l.b16 %v161
    %v541 = vunpack.c.h.b16 %v161
    %v542 = vunpack.c.l.b16 %v162
    %v543 = vunpack.c.h.b16 %v162
    %v544 = vunpack.c.l.b16 %v163
    %v545 = vunpack.c.h.b16 %v163
    %v546 = vunpack.c.l.b16 %v164
    %v547 = vunpack.c.h.b16 %v164
    %v548 = vunpack.c.l.b16 %v165
    %v549 = vunpack.c.h.b16 %v165
    %v550 = vunpack.c.l.b16 %v166
    %v551 = vunpack.c.h.b16 %v166
    %v552 = vunpack.c.l.b16 %v167
    %v553 = vunpack.c.h.b16 %v167
    %v554 = vunpack.c.l.b16 %v168
    %v555 = vunpack.c.h.b16 %v168
    %v556 = vunpack.c.l.b16 %v169
    %v557 = vunpack.c.h.b16 %v169
    %v558 = vunpack.c.l.b16 %v170
    %v559 = vunpack.c.h.b16 %v170
    %v560 = vunpack.c.l.b16 %v171
    %v561 = vunpack.c.h.b16 %v171
    %v562 = vunpack.c.l.b16 %v172
    %v563 = vunpack.c.h.b16 %v172
    %v564 = vunpack.c.l.b16 %v173
    %v565 = vunpack.c.h.b16 %v173
    %v566 = vunpack.c.l.b16 %v174
    %v567 = vunpack.c.h.b16 %v174
    %v568 = vunpack.c.l.b16 %v175
    %v569 = vunpack.c.h.b16 %v175
    %v570 = vunpack.c.l.b16 %v176
    %v571 = vunpack.c.h.b16 %v176
    %v572 = vunpack.c.l.b16 %v177
    %v573 = vunpack.c.h.b16 %v177
    %v574 = vunpack.c.l.b16 %v178
    %v575 = vunpack.c.h.b16 %v178
    %v576 = vunpack.c.l.b16 %v179
    %v577 = vunpack.c.h.b16 %v179
    %v578 = vunpack.c.l.b16 %v180
    %v579 = vunpack.c.h.b16 %v180
    %v580 = vunpack.c.l.b16 %v181
    %v581 = vunpack.c.h.b16 %v181
    %v582 = vunpack.c.l.b16 %v182
    %v583 = vunpack.c.h.b16 %v182
    %v584 = vunpack.c.l.b16 %v183
    %v585 = vunpack.c.h.b16 %v183
    %v586 = vunpack.c.l.b16 %v184
    %v587 = vunpack.c.h.b16 %v184
    %v588 = vunpack.c.l.b16 %v185
    %v589 = vunpack.c.h.b16 %v185
    %v590 = vunpack.c.l.b16 %v186
    %v591 = vunpack.c.h.b16 %v186
    %v592 = vunpack.c.l.b16 %v187
    %v593 = vunpack.c.h.b16 %v187
    %v594 = vunpack.c.l.b16 %v188
    %v595 = vunpack.c.h.b16 %v188
    %v596 = vunpack.c.l.b16 %v189
    %v597 = vunpack.c.h.b16 %v189
    %v598 = vunpack.c.l.b16 %v190
    %v599 = vunpack.c.h.b16 %v190
    %v600 = vunpack.c.l.b16 %v191
    %v601 = vunpack.c.h.b16 %v191
    %v602 = vunpack.c.l.b16 %v192
    %v603 = vunpack.c.h.b16 %v192
    %v604 = vunpack.c.l.b16 %v193
    %v605 = vunpack.c.h.b16 %v193
    %v606 = vunpack.c.l.b16 %v194
    %v607 = vunpack.c.h.b16 %v194
    %v608 = vunpack.c.l.b16 %v195
    %v609 = vunpack.c.h.b16 %v195
    %v610 = vunpack.c.l.b16 %v196
    %v611 = vunpack.c.h.b16 %v196
    %v612 = vunpack.c.l.b16 %v197
    %v613 = vunpack.c.h.b16 %v197
    %v614 = vunpack.c.l.b16 %v198
    %v615 = vunpack.c.h.b16 %v198
    %v616 = vunpack.c.l.b16 %v199
    %v617 = vunpack.c.h.b16 %v199
    %v618 = vunpack.c.l.b16 %v200
    %v619 = vunpack.c.h.b16 %v200
    %v620 = vunpack.c.l.b16 %v201
    %v621 = vunpack.c.h.b16 %v201
    %v622 = vunpack.c.l.b16 %v202
    %v623 = vunpack.c.h.b16 %v202
    %v624 = vunpack.c.l.b16 %v203
    %v625 = vunpack.c.h.b16 %v203
    %v626 = vunpack.c.l.b16 %v204
    %v627 = vunpack.c.h.b16 %v204
    %v628 = vunpack.c.l.b16 %v205
    %v629 = vunpack.c.h.b16 %v205
    %v630 = vunpack.c.l.b16 %v206
    %v631 = vunpack.c.h.b16 %v206
    %v632 = vunpack.c.l.b16 %v207
    %v633 = vunpack.c.h.b16 %v207
    %v634 = vunpack.c.l.b16 %v208
    %v635 = vunpack.c.h.b16 %v208
    %v636 = vunpack.c.l.b16 %v209
    %v637 = vunpack.c.h.b16 %v209
    %v638 = vunpack.c.l.b16 %v210
    %v639 = vunpack.c.h.b16 %v210
    %v640 = vpack.c.b16 %v514, %v512
    %v641 = vpack.c.b16 %v515, %v513
    %v642 = vpack.c.b16 %v518, %v516
    %v643 = vpack.c.b16 %v519, %v517
    %v644 = vpack.c.b16 %v522, %v520
    %v645 = vpack.c.b16 %v523, %v521
    %v646 = vpack.c.b16 %v526, %v524
    %v647 = vpack.c.b16 %v527, %v525
    %v648 = vpack.c.b16 %v530, %v528
    %v649 = vpack.c.b16 %v531, %v529
    %v650 = vpack.c.b16 %v534, %v532
    %v651 = vpack.c.b16 %v535, %v533
    %v652 = vpack.c.b16 %v538, %v536
    %v653 = vpack.c.b16 %v539, %v537
    %v654 = vpack.c.b16 %v542, %v540
    %v655 = vpack.c.b16 %v543, %v541
    %v656 = vpack.c.b16 %v546, %v544
    %v657 = vpack.c.b16 %v547, %v545
    %v658 = vpack.c.b16 %v550, %v548
    %v659 = vpack.c.b16 %v551, %v549
    %v660 = vpack.c.b16 %v554, %v552
    %v661 = vpack.c.b16 %v555, %v553
    %v662 = vpack.c.b16 %v558, %v556
    %v663 = vpack.c.b16 %v559, %v557
    %v664 = vpack.c.b16 %v562, %v560
    %v665 = vpack.c.b16 %v563, %v561
    %v666 = vpack.c.b16 %v566, %v564
    %v667 = vpack.c.b16 %v567, %v565
    %v668 = vpack.c.b16 %v570, %v568
    %v669 = vpack.c.b16 %v571, %v569
    %v670 = vpack.c.b16 %v574, %v572
    %v671 = vpack.c.b16 %v575, %v573
    %v672 = vpack.c.b16 %v578, %v576
    %v673 = vpack.c.b16 %v579, %v577
    %v674 = vpack.c.b16 %v582, %v580
    %v675 = vpack.c.b16 %v583, %v581
    %v676 = vpack.c.b16 %v586, %v584
    %v677 = vpack.c.b16 %v587, %v585
    %v678 = vpack.c.b16 %v590, %v588
    %v679 = vpack.c.b16 %v591, %v589
    %v680 = vpack.c.b16 %v594, %v592
    %v681 = vpack.c.b16 %v595, %v593
    %v682 = vpack.c.b16 %v598, %v596
    %v683 = vpack.c.b16 %v599, %v597
    %v684 = vpack.c.b16 %v602, %v600
    %v685 = vpack.c.b16 %v603, %v601
    %v686 = vpack.c.b16 %v606, %v604
    %v687 = vpack.c.b16 %v607, %v605
    %v688 = vpack.c.b16 %v610, %v608
    %v689 = vpack.c.b16 %v611, %v609
    %v690 = vpack.c.b16 %v614, %v612
    %v691 = vpack.c.b16 %v615, %v613
    %v692 = vpack.c.b16 %v618, %v616
    %v693 = vpack.c.b16 %v619, %v617
    %v694 = vpack.c.b16 %v622, %v620
    %v695 = vpack.c.b16 %v623, %v621
    %v696 = vpack.c.b16 %v626, %v624
    %v697 = vpack.c.b16 %v627, %v625
    %v698 = vpack.c.b16 %v630, %v628
    %v699 = vpack.c.b16 %v631, %v629
    %v700 = vpack.c.b16 %v634, %v632
    %v701 = vpack.c.b16 %v635, %v633
    %v702 = vpack.c.b16 %v638, %v636
    %v703 = vpack.c.b16 %v639, %v637
    %768 = vmatprep.subr.bf16.mxu0 %v655
    %769 = vmatpush1.bf16.msra.mxu0 %v654
    %770 = vmatprep.subr.bf16.mxu0 %v653
    %771 = vmatpush1.bf16.msra.mxu0 %v652
    %772 = vmatprep.subr.bf16.mxu0 %v651
    %773 = vmatpush1.bf16.msra.mxu0 %v650
    %774 = vmatprep.subr.bf16.mxu0 %v649
    %775 = vmatpush1.bf16.msra.mxu0 %v648
    %776 = vmatprep.subr.bf16.mxu0 %v647
    %777 = vmatpush1.bf16.msra.mxu0 %v646
    %778 = vmatprep.subr.bf16.mxu0 %v645
    %779 = vmatpush1.bf16.msra.mxu0 %v644
    %780 = vmatprep.subr.bf16.mxu0 %v643
    %781 = vmatpush1.bf16.msra.mxu0 %v642
    %782 = vmatprep.subr.bf16.mxu0 %v641
    %783 = vmatpush1.bf16.msra.mxu0 %v640
    %784 = vmatprep.subr.bf16.mxu0 %v671
    %785 = vmatpush2.bf16.msra.mxu0 %v670
    %786 = vmatprep.subr.bf16.mxu0 %v669
    %787 = vmatpush2.bf16.msra.mxu0 %v668
    %788 = vmatprep.subr.bf16.mxu0 %v667
    %789 = vmatpush2.bf16.msra.mxu0 %v666
    %790 = vmatprep.subr.bf16.mxu0 %v665
    %791 = vmatpush2.bf16.msra.mxu0 %v664
    %792 = vmatprep.subr.bf16.mxu0 %v663
    %793 = vmatpush2.bf16.msra.mxu0 %v662
    %794 = vmatprep.subr.bf16.mxu0 %v661
    %795 = vmatpush2.bf16.msra.mxu0 %v660
    %796 = vmatprep.subr.bf16.mxu0 %v659
    %797 = vmatpush2.bf16.msra.mxu0 %v658
    %798 = vmatprep.subr.bf16.mxu0 %v657
    %799 = vmatpush2.bf16.msra.mxu0 %v656
    %800 = vmatprep.mubr.bf16.mxu0 %v434
    %801 = vmatmul.mubr.bf16.gmra.mxu0 %v433
    %v802 = vpop.f32.mrf.mxu0
    %v803 = vadd.f32 %v441, %v802
    %v804 = vpop.f32.mrf.mxu0
    %v805 = vadd.f32 %v445, %v804
    %v806 = vpop.f32.mrf.mxu0
    %v807 = vpop.f32.mrf.mxu0
    %808 = vdwg.mxu0
    %809 = vmatprep.subr.bf16.mxu0 %v687
    %810 = vmatpush1.bf16.msra.mxu0 %v686
    %811 = vmatprep.subr.bf16.mxu0 %v685
    %812 = vmatpush1.bf16.msra.mxu0 %v684
    %813 = vmatprep.subr.bf16.mxu0 %v683
    %814 = vmatpush1.bf16.msra.mxu0 %v682
    %815 = vmatprep.subr.bf16.mxu0 %v681
    %816 = vmatpush1.bf16.msra.mxu0 %v680
    %817 = vmatprep.subr.bf16.mxu0 %v679
    %818 = vmatpush1.bf16.msra.mxu0 %v678
    %819 = vmatprep.subr.bf16.mxu0 %v677
    %820 = vmatpush1.bf16.msra.mxu0 %v676
    %821 = vmatprep.subr.bf16.mxu0 %v675
    %822 = vmatpush1.bf16.msra.mxu0 %v674
    %823 = vmatprep.subr.bf16.mxu0 %v673
    %824 = vmatpush1.bf16.msra.mxu0 %v672
    %825 = vmatprep.subr.bf16.mxu0 %v703
    %826 = vmatpush2.bf16.msra.mxu0 %v702
    %827 = vmatprep.subr.bf16.mxu0 %v701
    %828 = vmatpush2.bf16.msra.mxu0 %v700
    %829 = vmatprep.subr.bf16.mxu0 %v699
    %830 = vmatpush2.bf16.msra.mxu0 %v698
    %831 = vmatprep.subr.bf16.mxu0 %v697
    %832 = vmatpush2.bf16.msra.mxu0 %v696
    %833 = vmatprep.subr.bf16.mxu0 %v695
    %834 = vmatpush2.bf16.msra.mxu0 %v694
    %835 = vmatprep.subr.bf16.mxu0 %v693
    %836 = vmatpush2.bf16.msra.mxu0 %v692
    %837 = vmatprep.subr.bf16.mxu0 %v691
    %838 = vmatpush2.bf16.msra.mxu0 %v690
    %839 = vmatprep.subr.bf16.mxu0 %v689
    %840 = vmatpush2.bf16.msra.mxu0 %v688
    %841 = vmatprep.mubr.bf16.mxu0 %v436
    %842 = vmatmul.mubr.bf16.gmra.mxu0 %v435
    %v843 = vpop.f32.mrf.mxu0
    %v844 = vadd.f32 %v803, %v843
    %v845 = vpop.f32.mrf.mxu0
    %v846 = vadd.f32 %v805, %v845
    %v847 = vpop.f32.mrf.mxu0
    %v848 = vpop.f32.mrf.mxu0
    %849 = vdwg.mxu0
    %v850 = vtanh.pop %v844
    %v851 = vtanh.pop %v846
    %v852 = vpack.c.bf16 %v850, %v850
    %v853 = vpack.c.bf16 %v851, %v851
    %v855 = vlaneseq
    %v856 = vshrl.u32 %v855, 7
    %v857 = vsub.s32 0, %v856
    %v858 = vrot.slane %v293, %v857
    %v892 = vunpack.c.l.b16 %v211
    %v893 = vunpack.c.l.b16 %v212
    %v894 = vunpack.c.l.b16 %v213
    %v895 = vunpack.c.l.b16 %v214
    %v896 = vunpack.c.l.b16 %v215
    %v897 = vunpack.c.l.b16 %v216
    %v898 = vunpack.c.l.b16 %v217
    %v899 = vunpack.c.l.b16 %v218
    %v900 = vunpack.c.l.b16 %v219
    %v901 = vunpack.c.l.b16 %v220
    %v902 = vunpack.c.l.b16 %v221
    %v903 = vunpack.c.l.b16 %v222
    %v904 = vunpack.c.l.b16 %v223
    %v905 = vunpack.c.l.b16 %v224
    %v906 = vunpack.c.l.b16 %v225
    %v907 = vunpack.c.l.b16 %v226
    %v908 = vunpack.c.l.b16 %v227
    %v909 = vunpack.c.l.b16 %v228
    %v910 = vunpack.c.l.b16 %v229
    %v911 = vunpack.c.l.b16 %v230
    %v912 = vunpack.c.l.b16 %v231
    %v913 = vunpack.c.l.b16 %v232
    %v914 = vunpack.c.l.b16 %v233
    %v915 = vunpack.c.l.b16 %v234
    %v916 = vunpack.c.l.b16 %v235
    %v917 = vunpack.c.l.b16 %v236
    %v918 = vunpack.c.l.b16 %v237
    %v919 = vunpack.c.l.b16 %v238
    %v920 = vunpack.c.l.b16 %v239
    %v921 = vunpack.c.l.b16 %v240
    %v922 = vunpack.c.l.b16 %v241
    %v923 = vunpack.c.l.b16 %v242
    %v924 = vpack.c.b16 %v893, %v892
    %v925 = vpack.c.b16 %v895, %v894
    %v926 = vpack.c.b16 %v897, %v896
    %v927 = vpack.c.b16 %v899, %v898
    %v928 = vpack.c.b16 %v901, %v900
    %v929 = vpack.c.b16 %v903, %v902
    %v930 = vpack.c.b16 %v905, %v904
    %v931 = vpack.c.b16 %v907, %v906
    %v932 = vpack.c.b16 %v909, %v908
    %v933 = vpack.c.b16 %v911, %v910
    %v934 = vpack.c.b16 %v913, %v912
    %v935 = vpack.c.b16 %v915, %v914
    %v936 = vpack.c.b16 %v917, %v916
    %v937 = vpack.c.b16 %v919, %v918
    %v938 = vpack.c.b16 %v921, %v920
    %v939 = vpack.c.b16 %v923, %v922
    %956 = vmatprep.subr.bf16.mxu0 0
    %957 = vmatpush1.bf16.msra.mxu0 %v931
    %958 = vmatprep.subr.bf16.mxu0 0
    %959 = vmatpush1.bf16.msra.mxu0 %v930
    %960 = vmatprep.subr.bf16.mxu0 0
    %961 = vmatpush1.bf16.msra.mxu0 %v929
    %962 = vmatprep.subr.bf16.mxu0 0
    %963 = vmatpush1.bf16.msra.mxu0 %v928
    %964 = vmatprep.subr.bf16.mxu0 0
    %965 = vmatpush1.bf16.msra.mxu0 %v927
    %966 = vmatprep.subr.bf16.mxu0 0
    %967 = vmatpush1.bf16.msra.mxu0 %v926
    %968 = vmatprep.subr.bf16.mxu0 0
    %969 = vmatpush1.bf16.msra.mxu0 %v925
    %970 = vmatprep.subr.bf16.mxu0 0
    %971 = vmatpush1.bf16.msra.mxu0 %v924
    %972 = vmatprep.subr.bf16.mxu0 0
    %973 = vmatpush2.bf16.msra.mxu0 %v939
    %974 = vmatprep.subr.bf16.mxu0 0
    %975 = vmatpush2.bf16.msra.mxu0 %v938
    %976 = vmatprep.subr.bf16.mxu0 0
    %977 = vmatpush2.bf16.msra.mxu0 %v937
    %978 = vmatprep.subr.bf16.mxu0 0
    %979 = vmatpush2.bf16.msra.mxu0 %v936
    %980 = vmatprep.subr.bf16.mxu0 0
    %981 = vmatpush2.bf16.msra.mxu0 %v935
    %982 = vmatprep.subr.bf16.mxu0 0
    %983 = vmatpush2.bf16.msra.mxu0 %v934
    %984 = vmatprep.subr.bf16.mxu0 0
    %985 = vmatpush2.bf16.msra.mxu0 %v933
    %986 = vmatprep.subr.bf16.mxu0 0
    %987 = vmatpush2.bf16.msra.mxu0 %v932
    %988 = vmatprep.mubr.bf16.mxu0 %v853
    %989 = vmatmul.mubr.bf16.gmra.mxu0 %v852
    %v990 = vpop.f32.mrf.mxu0
    %v991 = vadd.f32 %v858, %v990
    %v992 = vpop.f32.mrf.mxu0
    %v993 = vpop.f32.mrf.mxu0
    %v994 = vpop.f32.mrf.mxu0
    %995 = vdwg.mxu0
    %v996 = vtanh.pop %v991
    %v997 = vpack.c.bf16 %v996, %v996
    %v999 = vlaneseq
    %v1000 = vshrl.u32 %v999, 7
    %v1001 = vsub.s32 0, %v1000
    %v1002 = vrot.slane %v294, %v1001
    %v1020 = vunpack.c.l.b16 %v243
    %v1021 = vunpack.c.l.b16 %v244
    %v1022 = vunpack.c.l.b16 %v245
    %v1023 = vunpack.c.l.b16 %v246
    %v1024 = vunpack.c.l.b16 %v247
    %v1025 = vunpack.c.l.b16 %v248
    %v1026 = vunpack.c.l.b16 %v249
    %v1027 = vunpack.c.l.b16 %v250
    %v1028 = vunpack.c.l.b16 %v251
    %v1029 = vunpack.c.l.b16 %v252
    %v1030 = vunpack.c.l.b16 %v253
    %v1031 = vunpack.c.l.b16 %v254
    %v1032 = vunpack.c.l.b16 %v255
    %v1033 = vunpack.c.l.b16 %v256
    %v1034 = vunpack.c.l.b16 %v257
    %v1035 = vunpack.c.l.b16 %v258
    %v1036 = vpack.c.b16 %v1021, %v1020
    %v1037 = vpack.c.b16 %v1023, %v1022
    %v1038 = vpack.c.b16 %v1025, %v1024
    %v1039 = vpack.c.b16 %v1027, %v1026
    %v1040 = vpack.c.b16 %v1029, %v1028
    %v1041 = vpack.c.b16 %v1031, %v1030
    %v1042 = vpack.c.b16 %v1033, %v1032
    %v1043 = vpack.c.b16 %v1035, %v1034
    %1052 = vmatprep.subr.bf16.mxu0 0
    %1053 = vmatpush1.bf16.msra.mxu0 %v1043
    %1054 = vmatprep.subr.bf16.mxu0 0
    %1055 = vmatpush1.bf16.msra.mxu0 %v1042
    %1056 = vmatprep.subr.bf16.mxu0 0
    %1057 = vmatpush1.bf16.msra.mxu0 %v1041
    %1058 = vmatprep.subr.bf16.mxu0 0
    %1059 = vmatpush1.bf16.msra.mxu0 %v1040
    %1060 = vmatprep.subr.bf16.mxu0 0
    %1061 = vmatpush1.bf16.msra.mxu0 %v1039
    %1062 = vmatprep.subr.bf16.mxu0 0
    %1063 = vmatpush1.bf16.msra.mxu0 %v1038
    %1064 = vmatprep.subr.bf16.mxu0 0
    %1065 = vmatpush1.bf16.msra.mxu0 %v1037
    %1066 = vmatprep.subr.bf16.mxu0 0
    %1067 = vmatpush1.bf16.msra.mxu0 %v1036
    %1068 = vmatprep.subr.bf16.mxu0 0
    %1069 = vmatpush2.bf16.msra.mxu0 0
    %1070 = vmatprep.subr.bf16.mxu0 0
    %1071 = vmatpush2.bf16.msra.mxu0 0
    %1072 = vmatprep.subr.bf16.mxu0 0
    %1073 = vmatpush2.bf16.msra.mxu0 0
    %1074 = vmatprep.subr.bf16.mxu0 0
    %1075 = vmatpush2.bf16.msra.mxu0 0
    %1076 = vmatprep.subr.bf16.mxu0 0
    %1077 = vmatpush2.bf16.msra.mxu0 0
    %1078 = vmatprep.subr.bf16.mxu0 0
    %1079 = vmatpush2.bf16.msra.mxu0 0
    %1080 = vmatprep.subr.bf16.mxu0 0
    %1081 = vmatpush2.bf16.msra.mxu0 0
    %1082 = vmatprep.subr.bf16.mxu0 0
    %1083 = vmatpush2.bf16.msra.mxu0 0
    %1084 = vmatprep.mubr.bf16.mxu0 0
    %1085 = vmatmul.mubr.bf16.gmra.mxu0 %v997
    %v1086 = vpop.f32.mrf.mxu0
    %v1087 = vadd.f32 %v1002, %v1086
    %v1088 = vpop.f32.mrf.mxu0
    %v1089 = vpop.f32.mrf.mxu0
    %v1090 = vpop.f32.mrf.mxu0
    %1091 = vdwg.mxu0
    %v1092 = vtanh.pop %v1087
    %v1093 = vpack.c.bf16 %v1092, %v1092
    %v1095 = vlaneseq
    %v1096 = vshrl.u32 %v1095, 7
    %v1097 = vsub.s32 0, %v1096
    %v1098 = vrot.slane %v295, %v1097
    %v1116 = vunpack.c.l.b16 %v259
    %v1117 = vunpack.c.l.b16 %v260
    %v1118 = vunpack.c.l.b16 %v261
    %v1119 = vunpack.c.l.b16 %v262
    %v1120 = vunpack.c.l.b16 %v263
    %v1121 = vunpack.c.l.b16 %v264
    %v1122 = vunpack.c.l.b16 %v265
    %v1123 = vunpack.c.l.b16 %v266
    %v1124 = vunpack.c.l.b16 %v267
    %v1125 = vunpack.c.l.b16 %v268
    %v1126 = vunpack.c.l.b16 %v269
    %v1127 = vunpack.c.l.b16 %v270
    %v1128 = vunpack.c.l.b16 %v271
    %v1129 = vunpack.c.l.b16 %v272
    %v1130 = vunpack.c.l.b16 %v273
    %v1131 = vunpack.c.l.b16 %v274
    %v1132 = vpack.c.b16 %v1117, %v1116
    %v1133 = vpack.c.b16 %v1119, %v1118
    %v1134 = vpack.c.b16 %v1121, %v1120
    %v1135 = vpack.c.b16 %v1123, %v1122
    %v1136 = vpack.c.b16 %v1125, %v1124
    %v1137 = vpack.c.b16 %v1127, %v1126
    %v1138 = vpack.c.b16 %v1129, %v1128
    %v1139 = vpack.c.b16 %v1131, %v1130
    %1148 = vmatprep.subr.bf16.mxu0 0
    %1149 = vmatpush1.bf16.msra.mxu0 %v1139
    %1150 = vmatprep.subr.bf16.mxu0 0
    %1151 = vmatpush1.bf16.msra.mxu0 %v1138
    %1152 = vmatprep.subr.bf16.mxu0 0
    %1153 = vmatpush1.bf16.msra.mxu0 %v1137
    %1154 = vmatprep.subr.bf16.mxu0 0
    %1155 = vmatpush1.bf16.msra.mxu0 %v1136
    %1156 = vmatprep.subr.bf16.mxu0 0
    %1157 = vmatpush1.bf16.msra.mxu0 %v1135
    %1158 = vmatprep.subr.bf16.mxu0 0
    %1159 = vmatpush1.bf16.msra.mxu0 %v1134
    %1160 = vmatprep.subr.bf16.mxu0 0
    %1161 = vmatpush1.bf16.msra.mxu0 %v1133
    %1162 = vmatprep.subr.bf16.mxu0 0
    %1163 = vmatpush1.bf16.msra.mxu0 %v1132
    %1164 = vmatprep.subr.bf16.mxu0 0
    %1165 = vmatpush2.bf16.msra.mxu0 0
    %1166 = vmatprep.subr.bf16.mxu0 0
    %1167 = vmatpush2.bf16.msra.mxu0 0
    %1168 = vmatprep.subr.bf16.mxu0 0
    %1169 = vmatpush2.bf16.msra.mxu0 0
    %1170 = vmatprep.subr.bf16.mxu0 0
    %1171 = vmatpush2.bf16.msra.mxu0 0
    %1172 = vmatprep.subr.bf16.mxu0 0
    %1173 = vmatpush2.bf16.msra.mxu0 0
    %1174 = vmatprep.subr.bf16.mxu0 0
    %1175 = vmatpush2.bf16.msra.mxu0 0
    %1176 = vmatprep.subr.bf16.mxu0 0
    %1177 = vmatpush2.bf16.msra.mxu0 0
    %1178 = vmatprep.subr.bf16.mxu0 0
    %1179 = vmatpush2.bf16.msra.mxu0 0
    %1180 = vmatprep.mubr.bf16.mxu0 0
    %1181 = vmatmul.mubr.bf16.gmra.mxu0 %v1093
    %v1182 = vpop.f32.mrf.mxu0
    %v1183 = vadd.f32 %v1098, %v1182
    %v1184 = vpop.f32.mrf.mxu0
    %v1185 = vpop.f32.mrf.mxu0
    %v1186 = vpop.f32.mrf.mxu0
    %1187 = vdwg.mxu0
    %v1188 = vtanh.pop %v1183
    %v1189 = vpack.c.bf16 %v1188, %v1188
    %v1191 = vlaneseq
    %v1192 = vshrl.u32 %v1191, 7
    %v1193 = vsub.s32 0, %v1192
    %v1194 = vrot.slane %v296, %v1193
    %v1212 = vunpack.c.l.b16 %v275
    %v1213 = vunpack.c.l.b16 %v276
    %v1214 = vunpack.c.l.b16 %v277
    %v1215 = vunpack.c.l.b16 %v278
    %v1216 = vunpack.c.l.b16 %v279
    %v1217 = vunpack.c.l.b16 %v280
    %v1218 = vunpack.c.l.b16 %v281
    %v1219 = vunpack.c.l.b16 %v282
    %v1220 = vunpack.c.l.b16 %v283
    %v1221 = vunpack.c.l.b16 %v284
    %v1222 = vunpack.c.l.b16 %v285
    %v1223 = vunpack.c.l.b16 %v286
    %v1224 = vunpack.c.l.b16 %v287
    %v1225 = vunpack.c.l.b16 %v288
    %v1226 = vunpack.c.l.b16 %v289
    %v1227 = vunpack.c.l.b16 %v290
    %v1228 = vpack.c.b16 %v1213, %v1212
    %v1229 = vpack.c.b16 %v1215, %v1214
    %v1230 = vpack.c.b16 %v1217, %v1216
    %v1231 = vpack.c.b16 %v1219, %v1218
    %v1232 = vpack.c.b16 %v1221, %v1220
    %v1233 = vpack.c.b16 %v1223, %v1222
    %v1234 = vpack.c.b16 %v1225, %v1224
    %v1235 = vpack.c.b16 %v1227, %v1226
    %1244 = vmatprep.subr.bf16.mxu0 0
    %1245 = vmatpush1.bf16.msra.mxu0 %v1235
    %1246 = vmatprep.subr.bf16.mxu0 0
    %1247 = vmatpush1.bf16.msra.mxu0 %v1234
    %1248 = vmatprep.subr.bf16.mxu0 0
    %1249 = vmatpush1.bf16.msra.mxu0 %v1233
    %1250 = vmatprep.subr.bf16.mxu0 0
    %1251 = vmatpush1.bf16.msra.mxu0 %v1232
    %1252 = vmatprep.subr.bf16.mxu0 0
    %1253 = vmatpush1.bf16.msra.mxu0 %v1231
    %1254 = vmatprep.subr.bf16.mxu0 0
    %1255 = vmatpush1.bf16.msra.mxu0 %v1230
    %1256 = vmatprep.subr.bf16.mxu0 0
    %1257 = vmatpush1.bf16.msra.mxu0 %v1229
    %1258 = vmatprep.subr.bf16.mxu0 0
    %1259 = vmatpush1.bf16.msra.mxu0 %v1228
    %1260 = vmatprep.subr.bf16.mxu0 0
    %1261 = vmatpush2.bf16.msra.mxu0 0
    %1262 = vmatprep.subr.bf16.mxu0 0
    %1263 = vmatpush2.bf16.msra.mxu0 0
    %1264 = vmatprep.subr.bf16.mxu0 0
    %1265 = vmatpush2.bf16.msra.mxu0 0
    %1266 = vmatprep.subr.bf16.mxu0 0
    %1267 = vmatpush2.bf16.msra.mxu0 0
    %1268 = vmatprep.subr.bf16.mxu0 0
    %1269 = vmatpush2.bf16.msra.mxu0 0
    %1270 = vmatprep.subr.bf16.mxu0 0
    %1271 = vmatpush2.bf16.msra.mxu0 0
    %1272 = vmatprep.subr.bf16.mxu0 0
    %1273 = vmatpush2.bf16.msra.mxu0 0
    %1274 = vmatprep.subr.bf16.mxu0 0
    %1275 = vmatpush2.bf16.msra.mxu0 0
    %1276 = vmatprep.mubr.bf16.mxu0 0
    %1277 = vmatmul.mubr.bf16.gmra.mxu0 %v1189
    %v1278 = vpop.f32.mrf.mxu0
    %v1279 = vadd.f32 %v1194, %v1278
    %v1280 = vpop.f32.mrf.mxu0
    %v1281 = vpop.f32.mrf.mxu0
    %v1282 = vpop.f32.mrf.mxu0
    %1283 = vdwg.mxu0
    %1284 = vst.msk [vmem:[#allocation16] sm:$0xff] %vm330, %v1279
    // Predicated region
    $region86: #{tpu_custom_call.1} parent=1 // pred_check
      _
    $region87: #{tpu_custom_call.1} parent=1 // pred_check_branch
      %1286 = sbr.rel (0) target = $region89
    $region88: #{tpu_custom_call.1} parent=1 // pred_region
      %s1288 = ssub.s32 128, 128
      %1289 = vsyncadd [#allocation4], %s1288
      %s1291 = sshll.u32 [#allocation16], 4
      %s1292 = int_to_ptr.vmem [resolvable:$true] %s1291
      %1294 = dma.vmem_to_hbm [thread:$0]  %s1292, 128, %s13, [#allocation4]
    $region89: #{tpu_custom_call.1} parent=1 // pred_fallthru
      _
    // Predicated region
    $region90: #{tpu_custom_call.1} parent=1 // pred_check
      _
    $region91: #{tpu_custom_call.1} parent=1 // pred_check_branch
      %1296 = sbr.rel (0) target = $region93
    $region92: #{tpu_custom_call.1} parent=1 // pred_region
      %1297 = dma.done [#allocation4], 128
    $region93: #{tpu_custom_call.1} parent=1 // pred_fallthru
      _
    %1298 = vsyncpa [#allocation3], 1
    %1299 = vsyncpa [#allocation6], 1
    %1300 = vsyncpa [#allocation9], 1
    %1301 = vsyncpa [#allocation12], 1
    %1302 = vsyncpa [#allocation15], 1
    %1303 = vsyncpa [#allocation4], 1

</llo_original>
